<compile_context>
chip_gen: v5e
topology: v5e:2x2
jax: 0.10.0
libtpu: 0.0.40
codegen_flags: <defaults>
</compile_context>

<pallas_src>
import functools

import jax
import jax.numpy as jnp
from jax.experimental import pallas as pl
from jax.experimental.pallas import tpu as pltpu

_LANES = 128
_PER_BUFFER_BYTES = 8 * 1024 * 1024      # post-layout per-input-buffer budget
_VMEM_LIMIT_BYTES = 40 * 1024 * 1024     # < 64 MiB physical VMEM on v7x
_SMALL_N_THRESHOLD = 1 << 16             # below this, plain jnp is faster


def _sum_kernel(x_ref, out_ref, *, nb, tile_r, rows):
    """Streaming sum over a lane-dense (rows, 128) view of flops_tensor.

    grid = (n_cores, nb): axis 0 is the 'parallel' core split, axis 1 the
    sequential reduction over row tiles.  out_ref is a per-core (1, 128)
    partial-sum accumulator, resident in VMEM across the reduction axis.
    """
    c = pl.program_id(0)
    i = pl.program_id(1)

    @pl.when(i == 0)
    def _init():
        out_ref[...] = jnp.zeros_like(out_ref)

    x = x_ref[...]                                           # (tile_r, 128)
    # Logical (un-clamped) first row of this block.  Rows >= `rows` are
    # ragged-tail garbage or clamped duplicate blocks -> mask to zero.
    row0 = (c * nb + i) * tile_r
    rid = row0 + jax.lax.broadcasted_iota(jnp.int32, x.shape, 0)
    xm = jnp.where(rid < rows, x, 0.0)
    out_ref[...] += jnp.sum(xm, axis=0, keepdims=True)       # (1, 128)


def _flops_tensor_mean0_sum(ft, *, max_tile_rows=None):
    """flops_tensor.mean(dim=0).sum() == sum(flops_tensor) / B  via Pallas."""
    b, f = ft.shape
    n = b * f

    # Lane-dense view: flatten (free bitcast reshape) and view as (rows, 128).
    flat = ft.reshape(-1)
    pad = (-n) % _LANES
    if pad:
        # TODO(synk): for huge B*F not divisible by 128 this pad is a full HBM
        # copy; a ragged-lane kernel variant would avoid it.
        flat = jnp.pad(flat, (0, pad))
    rows = (n + pad) // _LANES
    x2 = flat.reshape(rows, _LANES)

    # Tile rows from the POST-LAYOUT footprint: bytes = round_up(r,8)*128*4.
    budget_rows = (_PER_BUFFER_BYTES // (_LANES * 4) // 8) * 8   # 16384 rows
    if max_tile_rows is not None:
        budget_rows = min(budget_rows, max_tile_rows)
    budget_rows = max(budget_rows, 8)
    if rows <= budget_rows:
        tile_r = rows                      # full-extent block (always legal)
        nb_total = 1
    else:
        tile_r = budget_rows               # multiple of 8
        nb_total = pl.cdiv(rows, tile_r)

    # Split row tiles over (up to) two TensorCores; free on single-TC chips.
    n_cores = 2 if nb_total > 1 else 1
    nb = pl.cdiv(nb_total, n_cores)

    def in_map(c, i):
        # Clamp so no DMA window starts out of bounds; the kernel masks
        # duplicated / ragged rows via the un-clamped logical row index.
        return (jnp.minimum(c * nb + i, nb_total - 1), 0)

    kernel = functools.partial(_sum_kernel, nb=nb, tile_r=tile_r, rows=rows)

    partials = pl.pallas_call(
        kernel,
        out_shape=jax.ShapeDtypeStruct((n_cores, _LANES), jnp.float32),
        grid=(n_cores, nb),
        in_specs=[pl.BlockSpec((tile_r, _LANES), in_map)],
        out_specs=pl.BlockSpec((1, _LANES), lambda c, i: (c, 0)),
        compiler_params=pltpu.CompilerParams(
            dimension_semantics=("parallel", "arbitrary"),
            vmem_limit_bytes=_VMEM_LIMIT_BYTES),
        cost_estimate=pl.CostEstimate(
            flops=n, transcendentals=0, bytes_accessed=n * 4),
    )(x2)

    return jnp.sum(partials) / b


def spar_loss(flops_real, flops_ori, batch_size, den_target, lbda,
              L1_loss=False, use_kernel=None):
    """JAX/Pallas equivalent of the PyTorch spar_loss.forward.

    flops_real: (flops_tensor [B, frames], flops_conv1 [B], flops_fc [B])
    flops_ori : [n_layers]
    Returns a 0-dim array (L2 case) or shape-(1,) array (L1 case), like torch.
    """
    del batch_size  # unused in the reference forward as well

    flops_tensor, flops_conv1, flops_fc = flops_real
    ft = jnp.asarray(flops_tensor, jnp.float32)
    fc1 = jnp.asarray(flops_conv1, jnp.float32).reshape(-1)
    ffc = jnp.asarray(flops_fc, jnp.float32).reshape(-1)
    fori = jnp.asarray(flops_ori, jnp.float32).reshape(-1)

    b, frames = ft.shape
    if use_kernel is None:
        # Tiny inputs are launch/DMA-bound: let XLA fuse plain jnp instead.
        use_kernel = (b * frames) >= _SMALL_N_THRESHOLD

    if use_kernel:
        flops_conv = _flops_tensor_mean0_sum(ft)
    else:
        flops_conv = ft.mean(axis=0).sum()

    common = fc1.mean() * frames + ffc.mean()
    flops_ori_total = fori.sum() + common
    flops_real_total = flops_conv + common
    diff = flops_real_total / flops_ori_total - den_target

    if L1_loss:
        return (lbda * jnp.maximum(0.0, diff)).reshape(1)   # torch: shape [1]
    return lbda * diff * diff                               # torch: 0-dim


def _reference(flops_real, flops_ori, den_target, lbda, L1_loss=False):
    ft, fc1, ffc = (jnp.asarray(a, jnp.float32) for a in flops_real)
    fori = jnp.asarray(flops_ori, jnp.float32)
    frames = ft.shape[1]
    flops_conv = ft.mean(axis=0).sum()
    ori = fori.sum() + fc1.mean() * frames + ffc.mean()
    real = flops_conv + fc1.mean() * frames + ffc.mean()
    if L1_loss:
        return lbda * jnp.maximum(0.0, real / ori - den_target)
    return lbda * (real / ori - den_target) ** 2


if __name__ == "__main__":
    key = jax.random.PRNGKey(0)
    k1, k2, k3, k4, k5, k6 = jax.random.split(key, 6)

    # Small shapes consistent with the module.
    B, frames, n_layers = 2, 8, 8
    flops_tensor = jax.random.uniform(k1, (B, frames), jnp.float32,
                                      minval=1e6, maxval=5e6)
    flops_conv1 = jax.random.uniform(k2, (B,), jnp.float32,
                                     minval=1e5, maxval=5e5)
    flops_fc = jax.random.uniform(k3, (B,), jnp.float32,
                                  minval=1e4, maxval=5e4)
    flops_ori = jax.random.uniform(k4, (n_layers,), jnp.float32,
                                   minval=1e6, maxval=8e6)

    den_target, lbda = 0.5, 5.0
    fr = (flops_tensor, flops_conv1, flops_fc)

    for l1 in (False, True):
        ref = _reference(fr, flops_ori, den_target, lbda, L1_loss=l1)
        # Auto dispatch (tiny input -> fused jnp fast path).
        out_fast = spar_loss(fr, flops_ori, B, den_target, lbda, L1_loss=l1)
        jax.block_until_ready(out_fast)
        assert jnp.allclose(out_fast, ref, rtol=1e-4, atol=1e-5), (out_fast, ref)
        # Forced Pallas-kernel path on the same small shapes.
        out_kern = spar_loss(fr, flops_ori, B, den_target, lbda,
                             L1_loss=l1, use_kernel=True)
        jax.block_until_ready(out_kern)
        assert jnp.allclose(out_kern, ref, rtol=1e-4, atol=1e-5), (out_kern, ref)
        assert out_kern.shape == ((1,) if l1 else ())

    # Exercise the gridded / multi-core / masked-ragged paths of the reduction
    # kernel directly (small tile forces several row blocks + core split).
    ft_a = jax.random.uniform(k5, (64, 40), jnp.float32, minval=1e5, maxval=1e6)
    got_a = _flops_tensor_mean0_sum(ft_a, max_tile_rows=8)
    jax.block_until_ready(got_a)
    want_a = ft_a.mean(axis=0).sum()
    assert jnp.allclose(got_a, want_a, rtol=1e-5, atol=1e-2), (got_a, want_a)

    # Non-128-divisible B*F (lane-tail pad path) + ragged row tile.
    ft_b = jax.random.uniform(k6, (33, 17), jnp.float32, minval=1e5, maxval=1e6)
    got_b = _flops_tensor_mean0_sum(ft_b, max_tile_rows=8)
    jax.block_until_ready(got_b)
    want_b = ft_b.mean(axis=0).sum()
    assert jnp.allclose(got_b, want_b, rtol=1e-5, atol=1e-2), (got_b, want_b)

    print("KERNEL_OK")
</pallas_src>

<mosaic_0001>
module attributes {stable_mosaic.version = 11 : i64} {
  func.func @_sum_kernel(%arg0: i32, %arg1: i32, %arg2: memref<1x128xf32, #tpu.memory_space<vmem>>, %arg3: memref<1x128xf32, #tpu.memory_space<vmem>>) attributes {dimension_semantics = [#tpu.dimension_semantics<parallel>, #tpu.dimension_semantics<arbitrary>], iteration_bounds = array<i64: 1, 1>, scalar_prefetch = 0 : i64, scratch_operands = 0 : i64, tpu.core_type = #tpu.core_type<tc>, window_params = [{transform_indices = @transform_0, window_bounds = array<i64: 1, 128>}, {transform_indices = @transform_1, window_bounds = array<i64: 1, 128>}]} {
    %c0_i32 = arith.constant 0 : i32
    %0 = arith.cmpi eq, %arg1, %c0_i32 : i32
    %1 = arith.extui %0 : i1 to i32
    %c0_i32_0 = arith.constant 0 : i32
    %2 = arith.cmpi ne, %1, %c0_i32_0 : i32
    scf.if %2 {
      %cst_9 = arith.constant 0.000000e+00 : f32
      %19 = vector.broadcast %cst_9 : f32 to vector<1x128xf32>
      %c0_10 = arith.constant 0 : index
      %c0_11 = arith.constant 0 : index
      %20 = vector.load %arg3[%c0_10, %c0_11] : memref<1x128xf32, #tpu.memory_space<vmem>>, vector<1x128xf32>
      tpu.vector_store %arg3[%c0_10, %c0_11], %19 {strides = array<i32>} : memref<1x128xf32, #tpu.memory_space<vmem>>, vector<1x128xf32>,
    } else {
    }
    %c0 = arith.constant 0 : index
    %c0_1 = arith.constant 0 : index
    %3 = vector.load %arg2[%c0, %c0_1] : memref<1x128xf32, #tpu.memory_space<vmem>>, vector<1x128xf32>
    %c1_i32 = arith.constant 1 : i32
    %4 = arith.muli %arg0, %c1_i32 : i32
    %5 = arith.addi %4, %arg1 : i32
    %c1_i32_2 = arith.constant 1 : i32
    %6 = arith.muli %5, %c1_i32_2 : i32
    %7 = tpu.iota {dimensions = array<i32: 0>} : vector<1x128xi32>
    %8 = vector.broadcast %6 : i32 to vector<1x128xi32>
    %9 = arith.addi %8, %7 : vector<1x128xi32>
    %c1_i32_3 = arith.constant 1 : i32
    %10 = vector.broadcast %c1_i32_3 : i32 to vector<1x128xi32>
    %11 = arith.cmpi slt, %9, %10 : vector<1x128xi32>
    %cst = arith.constant 0.000000e+00 : f32
    %12 = vector.broadcast %cst : f32 to vector<1x128xf32>
    %13 = arith.select %11, %3, %12 : vector<1x128xi1>, vector<1x128xf32>
    %c0_4 = arith.constant 0 : index
    %c0_5 = arith.constant 0 : index
    %14 = vector.load %arg3[%c0_4, %c0_5] : memref<1x128xf32, #tpu.memory_space<vmem>>, vector<1x128xf32>
    %cst_6 = arith.constant dense<0.000000e+00> : vector<128xf32>
    %15 = vector.multi_reduction <add>, %13, %cst_6 [0] : vector<1x128xf32> to vector<128xf32>
    %16 = vector.shape_cast %15 : vector<128xf32> to vector<1x128xf32>
    %17 = arith.addf %14, %16 : vector<1x128xf32>
    %c0_7 = arith.constant 0 : index
    %c0_8 = arith.constant 0 : index
    %18 = vector.load %arg3[%c0_7, %c0_8] : memref<1x128xf32, #tpu.memory_space<vmem>>, vector<1x128xf32>
    tpu.vector_store %arg3[%c0_7, %c0_8], %17 {strides = array<i32>} : memref<1x128xf32, #tpu.memory_space<vmem>>, vector<1x128xf32>,
    return
  }
  func.func @transform_0(%arg0: i32, %arg1: i32) -> (i32, i32) {
    %c1_i32 = arith.constant 1 : i32
    %0 = arith.muli %arg0, %c1_i32 : i32
    %1 = arith.addi %0, %arg1 : i32
    %c0_i32 = arith.constant 0 : i32
    %2 = arith.minsi %1, %c0_i32 : i32
    %c0_i32_0 = arith.constant 0 : i32
    %c0_i32_1 = arith.constant 0 : i32
    return %2, %c0_i32_0 : i32, i32
  }
  func.func @transform_1(%arg0: i32, %arg1: i32) -> (i32, i32) {
    %c0_i32 = arith.constant 0 : i32
    %c0_i32_0 = arith.constant 0 : i32
    return %arg0, %c0_i32 : i32, i32
  }
}

</mosaic_0001>

<llo_original>
// kernel: tpu_custom_call.1
$region0: #{tpu_custom_call.1}
  #allocation0 [shape = 'u32[]', space=smem, size = 0x4, offset = 0x4, fixed_abs, tag = 'smem constant byte address 0x4 - core index']
  #allocation1 [shape = 'u32[72,128]{1,0:T(1,128)}', space=vmem, size = 0x9000, scoped, tag = 'internal scratch']
  %s0 = inlined_call_operand.hbm [shape: f32[1,128], index: 0, kind: input, shape index: {}]
  %s1 = inlined_call_operand.hbm [shape: f32[1,128], index: 1, kind: output, shape index: {}]
  %s2 = sld [smem:[#allocation0]]
  $region22: #{tpu_custom_call.1} parent=0
    _
  %s4 = ssub.s32 1, %s2
  %s5 = scalar_select 0, %s4, %s2
  $region1: #{tpu_custom_call.1} parent=0
    #allocation2 [shape = 'u8[512]{0}', space=vmem, size = 0x400, scoped, tag = 'input window, operand 0, single buffered']
    #allocation3 [shape = 's32[1]{0}', space=sflag, size = 0x4, scoped, tag = 'scoped memory for tpu_custom_call.1']
    #allocation4 [shape = 's32[1]{0}', space=sflag, size = 0x4, scoped, tag = 'scoped memory for tpu_custom_call.1']
    #allocation5 [shape = 'u8[512]{0}', space=vmem, size = 0x400, scoped, tag = 'output window, operand 0, single buffered']
    %6 = vsyncpa [#allocation3], 0
    %7 = vsyncpa [#allocation4], 0
    // Predicated region
    $region2: #{tpu_custom_call.1} parent=1 // pred_check
      _
    $region3: #{tpu_custom_call.1} parent=1 // pred_check_branch
      %9 = sbr.rel (0) target = $region5
    $region4: #{tpu_custom_call.1} parent=1 // pred_region
      %s10 = sadd.s32 0, 0
      %p11 = scmp.lt.s32.totalorder %s10, 0
      %s12 = scalar_select %p11, %s10, 0
      %14 = vsyncadd [#allocation3], 0
      %s15 = scalar_lea.hbm %s0, %s12
      %s17 = sshll.u32 %s15, 4
      %s18 = int_to_ptr.hbm [resolvable:$true] %s17
      %s19 = sshll.u32 [#allocation2], 4
      %s20 = int_to_ptr.vmem [resolvable:$true] %s19
      %22 = dma.hbm_to_vmem [thread:$0]  %s18, 16, %s20, [#allocation3]
    $region5: #{tpu_custom_call.1} parent=1 // pred_fallthru
      _
    // Predicated region
    $region6: #{tpu_custom_call.1} parent=1 // pred_check
      _
    $region7: #{tpu_custom_call.1} parent=1 // pred_check_branch
      %24 = sbr.rel (0) target = $region9
    $region8: #{tpu_custom_call.1} parent=1 // pred_region
      %26 = dma.done [#allocation3], 16
    $region9: #{tpu_custom_call.1} parent=1 // pred_fallthru
      _
    %s27 = sadd.s32 0, 0
    %p28 = scmp.lt.s32.totalorder %s27, 0
    %s29 = scalar_select %p28, %s27, 0
    %p30 = scmp.eq.s32.totalorder 0, 0
    // Predicated region
    $region10: #{tpu_custom_call.1} parent=1 // pred_check
      %p31 = pneg %p30
    $region11: #{tpu_custom_call.1} parent=1 // pred_check_branch
      %33 = sbr.rel (%p31) target = $region13
    $region12: #{tpu_custom_call.1} parent=1 // pred_region
      %34 = vst [vmem:[#allocation5] sm:$0x1] 0.0
    $region13: #{tpu_custom_call.1} parent=1 // pred_fallthru
      _
    %v35 = vld [vmem:[#allocation2] sm:$0x1]
    %s36 = sadd.s32 0, 0
    %v37 = vlaneseq
    %v38 = vshrl.u32 %v37, 7
    %v39 = vstv %s36
    %v40 = vadd.s32 %v39, %v38
    %vm41 = vcmp.lt.s32.totalorder %v40, 1
    %v42 = vsel %vm41, %v35, 0.0
    %v43 = vld [vmem:[#allocation5] sm:$0x1]
    %v44 = vadd.f32 %v42, 0.0
    %v45 = vadd.f32 %v43, %v44
    %46 = vst [vmem:[#allocation5] sm:$0x1] %v45
    // Predicated region
    $region14: #{tpu_custom_call.1} parent=1 // pred_check
      _
    $region15: #{tpu_custom_call.1} parent=1 // pred_check_branch
      %48 = sbr.rel (0) target = $region17
    $region16: #{tpu_custom_call.1} parent=1 // pred_region
      %50 = vsyncadd [#allocation4], 0
      %s52 = sshll.u32 [#allocation5], 4
      %s53 = int_to_ptr.vmem [resolvable:$true] %s52
      %s54 = sshll.u32 %s1, 4
      %s55 = int_to_ptr.hbm [resolvable:$true] %s54
      %57 = dma.vmem_to_hbm [thread:$0]  %s53, 16, %s55, [#allocation4]
    $region17: #{tpu_custom_call.1} parent=1 // pred_fallthru
      _
    // Predicated region
    $region18: #{tpu_custom_call.1} parent=1 // pred_check
      _
    $region19: #{tpu_custom_call.1} parent=1 // pred_check_branch
      %59 = sbr.rel (0) target = $region21
    $region20: #{tpu_custom_call.1} parent=1 // pred_region
      %61 = dma.done [#allocation4], 16
    $region21: #{tpu_custom_call.1} parent=1 // pred_fallthru
      _
    %62 = vsyncpa [#allocation3], 1
    %63 = vsyncpa [#allocation4], 1

</llo_original>
